<compile_context>
chip_gen: v6e
topology: v6e:2x2x1
jax: 0.10.0
libtpu: 0.0.40
codegen_flags: <defaults>
</compile_context>

<pallas_src>
import jax
import jax.numpy as jnp
from jax import lax
from jax.experimental import pallas as pl
from jax.experimental.pallas import tpu as pltpu

SELU_ALPHA = 1.6732632423543772
SELU_SCALE = 1.0507009873554805


def _round_up(x, m):
    return ((x + m - 1) // m) * m


def _choose_tile_n(n, itemsize, target_bytes=4 * 1024 * 1024, max_tile=256):
    """Adj row-tile sized so one [tile_n, N] block is at most a few MiB."""
    align = 16 if itemsize < 4 else 8          # keep bf16 sublane packing happy
    n_al = _round_up(n, align)
    rows = target_bytes // max(1, n_al * itemsize)
    rows = (int(rows) // align) * align
    return max(align, min(max_tile, rows, n_al))


def _make_kernel(tile_n, n_real, n_pad):
    def selu(v):
        return SELU_SCALE * jnp.where(v > 0.0, v, SELU_ALPHA * (jnp.exp(v) - 1.0))

    def kernel(x_ref, adj_ref, sub_ref,
               w1_ref, b1_ref, w2_ref, b2_ref,
               wfc1_ref, bfc1_ref, wfus_ref, bfus_ref,
               logp_ref, h1_ref, pool_ref):
        p = pl.program_id(0)                   # 0: build h1, 1: build h2 + head
        t = pl.program_id(1)                   # adj row-tile index
        row0 = pl.multiple_of(t * tile_n, tile_n)

        # ----------------- pass A: h1 rows for this adj tile -----------------
        @pl.when(p == 0)
        def _pass_a():
            # (adj_t @ x) @ W1 keeps the N^2 contraction width at nfeat.
            ax = jnp.dot(adj_ref[...], x_ref[...],
                         preferred_element_type=jnp.float32)
            h1 = jnp.dot(ax, w1_ref[...], preferred_element_type=jnp.float32)
            h1 = jnp.maximum(h1 + b1_ref[...], 0.0)
            h1_ref[pl.ds(row0, tile_n), :] = h1.astype(h1_ref.dtype)

        # --------- pass B: h2 rows, mean-pool accumulator, fused head --------
        @pl.when(p == 1)
        def _pass_b():
            @pl.when(t == 0)
            def _init():
                pool_ref[...] = jnp.zeros_like(pool_ref)

            # (adj_t @ h1) @ W2 keeps the N^2 contraction width at nhid.
            ah = jnp.dot(adj_ref[...], h1_ref[...],
                         preferred_element_type=jnp.float32)
            h2 = jnp.dot(ah, w2_ref[...], preferred_element_type=jnp.float32)
            h2 = jnp.maximum(h2 + b2_ref[...], 0.0)
            if n_pad != n_real:                # mask padded rows out of the pool
                rid = row0 + lax.broadcasted_iota(jnp.int32, (tile_n, 1), 0)
                h2 = jnp.where(rid < n_real, h2, 0.0)
            pool_ref[...] += jnp.sum(h2, axis=0, keepdims=True)

            @pl.when(t == pl.num_programs(1) - 1)
            def _head():
                pooled = selu(pool_ref[...] * (1.0 / n_real))
                # F.dropout in eval mode (training=False) is the identity.
                # TODO(synk): training-mode stochastic dropout not implemented.
                x_ext = (jnp.dot(sub_ref[...], wfc1_ref[...],
                                 preferred_element_type=jnp.float32)
                         + bfc1_ref[...])
                # fusion(cat([pooled, x_ext], dim=1)) as a split matmul:
                #   cat @ Wfus == pooled @ Wfus[:2*nhid] + x_ext @ Wfus[2*nhid:]
                wfus = wfus_ref[...]
                nh2 = pooled.shape[1]
                fused = (jnp.dot(pooled, wfus[:nh2, :],
                                 preferred_element_type=jnp.float32)
                         + jnp.dot(x_ext, wfus[nh2:, :],
                                   preferred_element_type=jnp.float32)
                         + bfus_ref[...])
                # log_softmax over the class dim (padded lanes carry -1e30 and
                # contribute exp(.)≈0, so real columns are exact).
                m = jnp.max(fused, axis=1, keepdims=True)
                lse = m + jnp.log(jnp.sum(jnp.exp(fused - m), axis=1,
                                          keepdims=True))
                logp_ref[...] = fused - lse

    return kernel


def gcn_fusion5_forward(x, adj, sub_fea, params, *, compute_dtype=jnp.bfloat16):
    n, nfeat = x.shape
    nhid = params["w1"].shape[1]
    nhid2 = params["w2"].shape[1]              # 2 * nhid
    nclass = params["w_fus"].shape[1]
    f32 = jnp.float32

    # L1(fusion.weight, 0) depends only on a parameter -> compute it outside
    # the kernel (removes a cross-lane reduce and a (1,1) masked store).
    l1_loss = jnp.mean(jnp.abs(params["w_fus"]))

    itemsize = jnp.dtype(compute_dtype).itemsize
    tile_n = _choose_tile_n(n, itemsize)
    n_pad = _round_up(n, tile_n)
    num_tiles = n_pad // tile_n

    # Lane-pad the fusion head to >=128 output lanes for a lane-dense store.
    nclass_pad = _round_up(max(nclass, 128), 128)
    wfus_p = jnp.zeros((params["w_fus"].shape[0], nclass_pad), f32)
    wfus_p = wfus_p.at[:, :nclass].set(params["w_fus"].astype(f32))
    bfus_p = jnp.full((1, nclass_pad), -1e30, f32)
    bfus_p = bfus_p.at[:, :nclass].set(params["b_fus"].astype(f32))

    # Pad nodes to the tile size; adj / x go to bf16 for the MXU (f32 accum).
    x_p = jnp.zeros((n_pad, nfeat), compute_dtype).at[:n, :].set(
        x.astype(compute_dtype))
    adj_p = jnp.zeros((n_pad, n_pad), compute_dtype).at[:n, :n].set(
        adj.astype(compute_dtype))

    const = lambda p, t: (0, 0)                # loaded once, stays resident

    grid_spec = pltpu.PrefetchScalarGridSpec(
        num_scalar_prefetch=0,
        grid=(2, num_tiles),
        in_specs=[
            pl.BlockSpec((n_pad, nfeat), const),                  # x
            pl.BlockSpec((tile_n, n_pad), lambda p, t: (t, 0)),   # adj row tile
            pl.BlockSpec(sub_fea.shape, const),                   # sub_fea
            pl.BlockSpec(params["w1"].shape, const),
            pl.BlockSpec(params["b1"].shape, const),
            pl.BlockSpec(params["w2"].shape, const),
            pl.BlockSpec(params["b2"].shape, const),
            pl.BlockSpec(params["w_fc1"].shape, const),
            pl.BlockSpec(params["b_fc1"].shape, const),
            pl.BlockSpec(wfus_p.shape, const),
            pl.BlockSpec(bfus_p.shape, const),
        ],
        out_specs=pl.BlockSpec((1, nclass_pad), const),
        scratch_shapes=[
            pltpu.VMEM((n_pad, nhid), compute_dtype),             # h1
            pltpu.VMEM((1, nhid2), jnp.float32),                  # pooled sum
        ],
    )

    logp_pad = pl.pallas_call(
        _make_kernel(tile_n, n, n_pad),
        out_shape=jax.ShapeDtypeStruct((1, nclass_pad), jnp.float32),
        grid_spec=grid_spec,
        compiler_params=pltpu.CompilerParams(
            dimension_semantics=("arbitrary", "arbitrary")),
    )(x_p, adj_p, sub_fea.astype(f32),
      params["w1"].astype(f32), params["b1"].astype(f32),
      params["w2"].astype(f32), params["b2"].astype(f32),
      params["w_fc1"].astype(f32), params["b_fc1"].astype(f32),
      wfus_p, bfus_p)

    return logp_pad[:, :nclass], l1_loss


def init_params(key, nfeat, nfeat_ext, nhid, nclass):
    ks = jax.random.split(key, 8)
    f32 = jnp.float32
    return {
        # GraphConvolution weights are stored [in, out].
        "w1": jax.random.normal(ks[0], (nfeat, nhid), f32) * 0.1,
        "b1": jax.random.normal(ks[1], (1, nhid), f32) * 0.1,
        "w2": jax.random.normal(ks[2], (nhid, 2 * nhid), f32) * 0.1,
        "b2": jax.random.normal(ks[3], (1, 2 * nhid), f32) * 0.1,
        # nn.Linear weights are [out, in] in PyTorch -> stored here as [in, out].
        "w_fc1": jax.random.normal(ks[4], (nfeat_ext, nhid), f32) * 0.1,
        "b_fc1": jax.random.normal(ks[5], (1, nhid), f32) * 0.1,
        "w_fus": jax.random.normal(ks[6], (3 * nhid, nclass), f32) * 0.1,
        "b_fus": jax.random.normal(ks[7], (1, nclass), f32) * 0.1,
    }


if __name__ == "__main__":
    # Small shapes consistent with the forward pass.
    N = 16          # graph nodes
    nfeat = 8       # node feature dim
    nfeat_ext = 8   # external (sub_fea) feature dim
    nhid = 32
    nclass = 8

    key = jax.random.PRNGKey(0)
    k_x, k_adj, k_sub, k_p = jax.random.split(key, 4)

    x = jax.random.normal(k_x, (N, nfeat), jnp.float32)
    a = jax.random.uniform(k_adj, (N, N), jnp.float32)
    adj = (a + a.T) * 0.5
    adj = adj / jnp.sum(adj, axis=1, keepdims=True)
    sub_fea = jax.random.normal(k_sub, (1, nfeat_ext), jnp.float32)

    params = init_params(k_p, nfeat, nfeat_ext, nhid, nclass)

    logp, l1_loss = gcn_fusion5_forward(x, adj, sub_fea, params)
    jax.block_until_ready((logp, l1_loss))

    assert logp.shape == (1, nclass)
    assert l1_loss.shape == ()
    assert bool(jnp.all(jnp.isfinite(logp)))
    print("KERNEL_OK")
</pallas_src>

<mosaic_0001>
module attributes {stable_mosaic.version = 11 : i64} {
  func.func @kernel(%arg0: i32, %arg1: i32, %arg2: memref<16x8xbf16, #tpu.memory_space<vmem>>, %arg3: memref<16x16xbf16, #tpu.memory_space<vmem>>, %arg4: memref<1x8xf32, #tpu.memory_space<vmem>>, %arg5: memref<8x32xf32, #tpu.memory_space<vmem>>, %arg6: memref<1x32xf32, #tpu.memory_space<vmem>>, %arg7: memref<32x64xf32, #tpu.memory_space<vmem>>, %arg8: memref<1x64xf32, #tpu.memory_space<vmem>>, %arg9: memref<8x32xf32, #tpu.memory_space<vmem>>, %arg10: memref<1x32xf32, #tpu.memory_space<vmem>>, %arg11: memref<96x128xf32, #tpu.memory_space<vmem>>, %arg12: memref<1x128xf32, #tpu.memory_space<vmem>>, %arg13: memref<1x128xf32, #tpu.memory_space<vmem>>, %arg14: memref<16x32xbf16, #tpu.memory_space<vmem>>, %arg15: memref<1x64xf32, #tpu.memory_space<vmem>>) attributes {dimension_semantics = [#tpu.dimension_semantics<arbitrary>, #tpu.dimension_semantics<arbitrary>], iteration_bounds = array<i64: 2, 1>, scalar_prefetch = 0 : i64, scratch_operands = 2 : i64, tpu.core_type = #tpu.core_type<tc>, window_params = [{pipeline_mode = #tpu.pipeline_mode<synchronous>, transform_indices = @transform_0, window_bounds = array<i64: 16, 8>}, {transform_indices = @transform_1, window_bounds = array<i64: 16, 16>}, {pipeline_mode = #tpu.pipeline_mode<synchronous>, transform_indices = @transform_2, window_bounds = array<i64: 1, 8>}, {pipeline_mode = #tpu.pipeline_mode<synchronous>, transform_indices = @transform_3, window_bounds = array<i64: 8, 32>}, {pipeline_mode = #tpu.pipeline_mode<synchronous>, transform_indices = @transform_4, window_bounds = array<i64: 1, 32>}, {pipeline_mode = #tpu.pipeline_mode<synchronous>, transform_indices = @transform_5, window_bounds = array<i64: 32, 64>}, {pipeline_mode = #tpu.pipeline_mode<synchronous>, transform_indices = @transform_6, window_bounds = array<i64: 1, 64>}, {pipeline_mode = #tpu.pipeline_mode<synchronous>, transform_indices = @transform_7, window_bounds = array<i64: 8, 32>}, {pipeline_mode = #tpu.pipeline_mode<synchronous>, transform_indices = @transform_8, window_bounds = array<i64: 1, 32>}, {pipeline_mode = #tpu.pipeline_mode<synchronous>, transform_indices = @transform_9, window_bounds = array<i64: 96, 128>}, {pipeline_mode = #tpu.pipeline_mode<synchronous>, transform_indices = @transform_10, window_bounds = array<i64: 1, 128>}, {pipeline_mode = #tpu.pipeline_mode<synchronous>, transform_indices = @transform_11, window_bounds = array<i64: 1, 128>}]} {
    %c16_i32 = arith.constant 16 : i32
    %0 = arith.muli %arg1, %c16_i32 : i32
    %1 = tpu.assume_multiple %0, 16 : i32
    %c0_i32 = arith.constant 0 : i32
    %2 = arith.cmpi eq, %arg0, %c0_i32 : i32
    %3 = arith.extui %2 : i1 to i32
    %c0_i32_0 = arith.constant 0 : i32
    %4 = arith.cmpi ne, %3, %c0_i32_0 : i32
    scf.if %4 {
      %c0 = arith.constant 0 : index
      %c0_2 = arith.constant 0 : index
      %8 = vector.load %arg3[%c0, %c0_2] : memref<16x16xbf16, #tpu.memory_space<vmem>>, vector<16x16xbf16>
      %c0_3 = arith.constant 0 : index
      %c0_4 = arith.constant 0 : index
      %9 = vector.load %arg2[%c0_3, %c0_4] : memref<16x8xbf16, #tpu.memory_space<vmem>>, vector<16x8xbf16>
      %cst = arith.constant dense<0.000000e+00> : vector<16x8xf32>
      %10 = tpu.matmul %8, %9, %cst {dimension_numbers = #tpu.dot_dimension_numbers<[1], [0], [0], [1], [0, 0, 1, 1], [], []>} : vector<16x16xbf16>, vector<16x8xbf16>, vector<16x8xf32> -> vector<16x8xf32>
      %c0_5 = arith.constant 0 : index
      %c0_6 = arith.constant 0 : index
      %11 = vector.load %arg5[%c0_5, %c0_6] : memref<8x32xf32, #tpu.memory_space<vmem>>, vector<8x32xf32>
      %cst_7 = arith.constant dense<0.000000e+00> : vector<16x32xf32>
      %12 = tpu.matmul %10, %11, %cst_7 {dimension_numbers = #tpu.dot_dimension_numbers<[1], [0], [0], [1], [0, 0, 1, 1], [], []>} : vector<16x8xf32>, vector<8x32xf32>, vector<16x32xf32> -> vector<16x32xf32>
      %c0_8 = arith.constant 0 : index
      %c0_9 = arith.constant 0 : index
      %13 = vector.load %arg6[%c0_8, %c0_9] : memref<1x32xf32, #tpu.memory_space<vmem>>, vector<1x32xf32>
      %14 = vector.broadcast %13 : vector<1x32xf32> to vector<16x32xf32>
      %15 = arith.addf %12, %14 : vector<16x32xf32>
      %cst_10 = arith.constant 0.000000e+00 : f32
      %16 = vector.broadcast %cst_10 : f32 to vector<16x32xf32>
      %17 = arith.maximumf %15, %16 : vector<16x32xf32>
      %18 = arith.truncf %17 : vector<16x32xf32> to vector<16x32xbf16>
      %19 = arith.index_cast %1 : i32 to index
      %c0_11 = arith.constant 0 : index
      %20 = vector.load %arg14[%19, %c0_11] : memref<16x32xbf16, #tpu.memory_space<vmem>>, vector<16x32xbf16>
      tpu.vector_store %arg14[%19, %c0_11], %18 {strides = array<i32>} : memref<16x32xbf16, #tpu.memory_space<vmem>>, vector<16x32xbf16>,
    } else {
    }
    %c1_i32 = arith.constant 1 : i32
    %5 = arith.cmpi eq, %arg0, %c1_i32 : i32
    %6 = arith.extui %5 : i1 to i32
    %c0_i32_1 = arith.constant 0 : i32
    %7 = arith.cmpi ne, %6, %c0_i32_1 : i32
    scf.if %7 {
      %c0_i32_2 = arith.constant 0 : i32
      %8 = arith.cmpi eq, %arg1, %c0_i32_2 : i32
      %9 = arith.extui %8 : i1 to i32
      %c0_i32_3 = arith.constant 0 : i32
      %10 = arith.cmpi ne, %9, %c0_i32_3 : i32
      scf.if %10 {
        %cst_20 = arith.constant 0.000000e+00 : f32
        %29 = vector.broadcast %cst_20 : f32 to vector<1x64xf32>
        %c0_21 = arith.constant 0 : index
        %c0_22 = arith.constant 0 : index
        %30 = vector.load %arg15[%c0_21, %c0_22] : memref<1x64xf32, #tpu.memory_space<vmem>>, vector<1x64xf32>
        tpu.vector_store %arg15[%c0_21, %c0_22], %29 {strides = array<i32>} : memref<1x64xf32, #tpu.memory_space<vmem>>, vector<1x64xf32>,
      } else {
      }
      %c0 = arith.constant 0 : index
      %c0_4 = arith.constant 0 : index
      %11 = vector.load %arg3[%c0, %c0_4] : memref<16x16xbf16, #tpu.memory_space<vmem>>, vector<16x16xbf16>
      %c0_5 = arith.constant 0 : index
      %c0_6 = arith.constant 0 : index
      %12 = vector.load %arg14[%c0_5, %c0_6] : memref<16x32xbf16, #tpu.memory_space<vmem>>, vector<16x32xbf16>
      %cst = arith.constant dense<0.000000e+00> : vector<16x32xf32>
      %13 = tpu.matmul %11, %12, %cst {dimension_numbers = #tpu.dot_dimension_numbers<[1], [0], [0], [1], [0, 0, 1, 1], [], []>} : vector<16x16xbf16>, vector<16x32xbf16>, vector<16x32xf32> -> vector<16x32xf32>
      %c0_7 = arith.constant 0 : index
      %c0_8 = arith.constant 0 : index
      %14 = vector.load %arg7[%c0_7, %c0_8] : memref<32x64xf32, #tpu.memory_space<vmem>>, vector<32x64xf32>
      %cst_9 = arith.constant dense<0.000000e+00> : vector<16x64xf32>
      %15 = tpu.matmul %13, %14, %cst_9 {dimension_numbers = #tpu.dot_dimension_numbers<[1], [0], [0], [1], [0, 0, 1, 1], [], []>} : vector<16x32xf32>, vector<32x64xf32>, vector<16x64xf32> -> vector<16x64xf32>
      %c0_10 = arith.constant 0 : index
      %c0_11 = arith.constant 0 : index
      %16 = vector.load %arg8[%c0_10, %c0_11] : memref<1x64xf32, #tpu.memory_space<vmem>>, vector<1x64xf32>
      %17 = vector.broadcast %16 : vector<1x64xf32> to vector<16x64xf32>
      %18 = arith.addf %15, %17 : vector<16x64xf32>
      %cst_12 = arith.constant 0.000000e+00 : f32
      %19 = vector.broadcast %cst_12 : f32 to vector<16x64xf32>
      %20 = arith.maximumf %18, %19 : vector<16x64xf32>
      %c0_13 = arith.constant 0 : index
      %c0_14 = arith.constant 0 : index
      %21 = vector.load %arg15[%c0_13, %c0_14] : memref<1x64xf32, #tpu.memory_space<vmem>>, vector<1x64xf32>
      %cst_15 = arith.constant dense<0.000000e+00> : vector<64xf32>
      %22 = vector.multi_reduction <add>, %20, %cst_15 [0] : vector<16x64xf32> to vector<64xf32>
      %23 = vector.shape_cast %22 : vector<64xf32> to vector<1x64xf32>
      %24 = arith.addf %21, %23 : vector<1x64xf32>
      %c0_16 = arith.constant 0 : index
      %c0_17 = arith.constant 0 : index
      %25 = vector.load %arg15[%c0_16, %c0_17] : memref<1x64xf32, #tpu.memory_space<vmem>>, vector<1x64xf32>
      tpu.vector_store %arg15[%c0_16, %c0_17], %24 {strides = array<i32>} : memref<1x64xf32, #tpu.memory_space<vmem>>, vector<1x64xf32>,
      %c0_i32_18 = arith.constant 0 : i32
      %26 = arith.cmpi eq, %arg1, %c0_i32_18 : i32
      %27 = arith.extui %26 : i1 to i32
      %c0_i32_19 = arith.constant 0 : i32
      %28 = arith.cmpi ne, %27, %c0_i32_19 : i32
      scf.if %28 {
        %c0_20 = arith.constant 0 : index
        %c0_21 = arith.constant 0 : index
        %29 = vector.load %arg15[%c0_20, %c0_21] : memref<1x64xf32, #tpu.memory_space<vmem>>, vector<1x64xf32>
        %cst_22 = arith.constant 6.250000e-02 : f32
        %30 = vector.broadcast %cst_22 : f32 to vector<1x64xf32>
        %31 = arith.mulf %29, %30 : vector<1x64xf32>
        %cst_23 = arith.constant 0.000000e+00 : f32
        %32 = vector.broadcast %cst_23 : f32 to vector<1x64xf32>
        %33 = arith.cmpf ogt, %31, %32 : vector<1x64xf32>
        %34 = math.exp %31 : vector<1x64xf32>
        %cst_24 = arith.constant 1.000000e+00 : f32
        %35 = vector.broadcast %cst_24 : f32 to vector<1x64xf32>
        %36 = arith.subf %34, %35 : vector<1x64xf32>
        %cst_25 = arith.constant 1.67326319 : f32
        %37 = vector.broadcast %cst_25 : f32 to vector<1x64xf32>
        %38 = arith.mulf %37, %36 : vector<1x64xf32>
        %39 = arith.select %33, %31, %38 : vector<1x64xi1>, vector<1x64xf32>
        %cst_26 = arith.constant 1.05070102 : f32
        %40 = vector.broadcast %cst_26 : f32 to vector<1x64xf32>
        %41 = arith.mulf %40, %39 : vector<1x64xf32>
        %c0_27 = arith.constant 0 : index
        %c0_28 = arith.constant 0 : index
        %42 = vector.load %arg4[%c0_27, %c0_28] : memref<1x8xf32, #tpu.memory_space<vmem>>, vector<1x8xf32>
        %c0_29 = arith.constant 0 : index
        %c0_30 = arith.constant 0 : index
        %43 = vector.load %arg9[%c0_29, %c0_30] : memref<8x32xf32, #tpu.memory_space<vmem>>, vector<8x32xf32>
        %cst_31 = arith.constant dense<0.000000e+00> : vector<1x32xf32>
        %44 = tpu.matmul %42, %43, %cst_31 {dimension_numbers = #tpu.dot_dimension_numbers<[1], [0], [0], [1], [0, 0, 1, 1], [], []>} : vector<1x8xf32>, vector<8x32xf32>, vector<1x32xf32> -> vector<1x32xf32>
        %c0_32 = arith.constant 0 : index
        %c0_33 = arith.constant 0 : index
        %45 = vector.load %arg10[%c0_32, %c0_33] : memref<1x32xf32, #tpu.memory_space<vmem>>, vector<1x32xf32>
        %46 = arith.addf %44, %45 : vector<1x32xf32>
        %c0_34 = arith.constant 0 : index
        %c0_35 = arith.constant 0 : index
        %47 = vector.load %arg11[%c0_34, %c0_35] : memref<96x128xf32, #tpu.memory_space<vmem>>, vector<96x128xf32>
        %48 = vector.extract_strided_slice %47 {offsets = [0, 0], sizes = [64, 128], strides = [1, 1]} : vector<96x128xf32> to vector<64x128xf32>
        %cst_36 = arith.constant dense<0.000000e+00> : vector<1x128xf32>
        %49 = tpu.matmul %41, %48, %cst_36 {dimension_numbers = #tpu.dot_dimension_numbers<[1], [0], [0], [1], [0, 0, 1, 1], [], []>} : vector<1x64xf32>, vector<64x128xf32>, vector<1x128xf32> -> vector<1x128xf32>
        %50 = vector.extract_strided_slice %47 {offsets = [64, 0], sizes = [32, 128], strides = [1, 1]} : vector<96x128xf32> to vector<32x128xf32>
        %cst_37 = arith.constant dense<0.000000e+00> : vector<1x128xf32>
        %51 = tpu.matmul %46, %50, %cst_37 {dimension_numbers = #tpu.dot_dimension_numbers<[1], [0], [0], [1], [0, 0, 1, 1], [], []>} : vector<1x32xf32>, vector<32x128xf32>, vector<1x128xf32> -> vector<1x128xf32>
        %52 = arith.addf %49, %51 : vector<1x128xf32>
        %c0_38 = arith.constant 0 : index
        %c0_39 = arith.constant 0 : index
        %53 = vector.load %arg12[%c0_38, %c0_39] : memref<1x128xf32, #tpu.memory_space<vmem>>, vector<1x128xf32>
        %54 = arith.addf %52, %53 : vector<1x128xf32>
        %cst_40 = arith.constant dense<0xFF800000> : vector<1xf32>
        %55 = vector.multi_reduction <maximumf>, %54, %cst_40 [1] : vector<1x128xf32> to vector<1xf32>
        %56 = vector.shape_cast %55 : vector<1xf32> to vector<1x1xf32>
        %57 = vector.broadcast %56 : vector<1x1xf32> to vector<1x128xf32>
        %58 = arith.subf %54, %57 : vector<1x128xf32>
        %59 = math.exp %58 : vector<1x128xf32>
        %cst_41 = arith.constant dense<0.000000e+00> : vector<1xf32>
        %60 = vector.multi_reduction <add>, %59, %cst_41 [1] : vector<1x128xf32> to vector<1xf32>
        %61 = vector.shape_cast %60 : vector<1xf32> to vector<1x1xf32>
        %62 = math.log %61 : vector<1x1xf32>
        %63 = arith.addf %56, %62 : vector<1x1xf32>
        %64 = vector.broadcast %63 : vector<1x1xf32> to vector<1x128xf32>
        %65 = arith.subf %54, %64 : vector<1x128xf32>
        %c0_42 = arith.constant 0 : index
        %c0_43 = arith.constant 0 : index
        %66 = vector.load %arg13[%c0_42, %c0_43] : memref<1x128xf32, #tpu.memory_space<vmem>>, vector<1x128xf32>
        tpu.vector_store %arg13[%c0_42, %c0_43], %65 {strides = array<i32>} : memref<1x128xf32, #tpu.memory_space<vmem>>, vector<1x128xf32>,
      } else {
      }
    } else {
    }
    return
  }
  func.func @transform_0(%arg0: i32, %arg1: i32) -> (i32, i32) {
    %c0_i32 = arith.constant 0 : i32
    %c0_i32_0 = arith.constant 0 : i32
    %c0_i32_1 = arith.constant 0 : i32
    return %c0_i32, %c0_i32_0 : i32, i32
  }
  func.func @transform_1(%arg0: i32, %arg1: i32) -> (i32, i32) {
    %c0_i32 = arith.constant 0 : i32
    %c0_i32_0 = arith.constant 0 : i32
    return %arg1, %c0_i32 : i32, i32
  }
  func.func @transform_2(%arg0: i32, %arg1: i32) -> (i32, i32) {
    %c0_i32 = arith.constant 0 : i32
    %c0_i32_0 = arith.constant 0 : i32
    %c0_i32_1 = arith.constant 0 : i32
    return %c0_i32, %c0_i32_0 : i32, i32
  }
  func.func @transform_3(%arg0: i32, %arg1: i32) -> (i32, i32) {
    %c0_i32 = arith.constant 0 : i32
    %c0_i32_0 = arith.constant 0 : i32
    %c0_i32_1 = arith.constant 0 : i32
    return %c0_i32, %c0_i32_0 : i32, i32
  }
  func.func @transform_4(%arg0: i32, %arg1: i32) -> (i32, i32) {
    %c0_i32 = arith.constant 0 : i32
    %c0_i32_0 = arith.constant 0 : i32
    %c0_i32_1 = arith.constant 0 : i32
    return %c0_i32, %c0_i32_0 : i32, i32
  }
  func.func @transform_5(%arg0: i32, %arg1: i32) -> (i32, i32) {
    %c0_i32 = arith.constant 0 : i32
    %c0_i32_0 = arith.constant 0 : i32
    %c0_i32_1 = arith.constant 0 : i32
    return %c0_i32, %c0_i32_0 : i32, i32
  }
  func.func @transform_6(%arg0: i32, %arg1: i32) -> (i32, i32) {
    %c0_i32 = arith.constant 0 : i32
    %c0_i32_0 = arith.constant 0 : i32
    %c0_i32_1 = arith.constant 0 : i32
    return %c0_i32, %c0_i32_0 : i32, i32
  }
  func.func @transform_7(%arg0: i32, %arg1: i32) -> (i32, i32) {
    %c0_i32 = arith.constant 0 : i32
    %c0_i32_0 = arith.constant 0 : i32
    %c0_i32_1 = arith.constant 0 : i32
    return %c0_i32, %c0_i32_0 : i32, i32
  }
  func.func @transform_8(%arg0: i32, %arg1: i32) -> (i32, i32) {
    %c0_i32 = arith.constant 0 : i32
    %c0_i32_0 = arith.constant 0 : i32
    %c0_i32_1 = arith.constant 0 : i32
    return %c0_i32, %c0_i32_0 : i32, i32
  }
  func.func @transform_9(%arg0: i32, %arg1: i32) -> (i32, i32) {
    %c0_i32 = arith.constant 0 : i32
    %c0_i32_0 = arith.constant 0 : i32
    %c0_i32_1 = arith.constant 0 : i32
    return %c0_i32, %c0_i32_0 : i32, i32
  }
  func.func @transform_10(%arg0: i32, %arg1: i32) -> (i32, i32) {
    %c0_i32 = arith.constant 0 : i32
    %c0_i32_0 = arith.constant 0 : i32
    %c0_i32_1 = arith.constant 0 : i32
    return %c0_i32, %c0_i32_0 : i32, i32
  }
  func.func @transform_11(%arg0: i32, %arg1: i32) -> (i32, i32) {
    %c0_i32 = arith.constant 0 : i32
    %c0_i32_0 = arith.constant 0 : i32
    %c0_i32_1 = arith.constant 0 : i32
    return %c0_i32, %c0_i32_0 : i32, i32
  }
}

</mosaic_0001>

<llo_original>
// kernel: tpu_custom_call.1
$region0: #{tpu_custom_call.1}
  #allocation0 [shape = 'u32[]', space=smem, size = 0x4, offset = 0x4, fixed_abs, tag = 'smem constant byte address 0x4 - core index']
  #allocation1 [shape = 'u32[144,128]{1,0:T(1,128)}', space=vmem, size = 0x12000, scoped, tag = 'internal scratch']
  #allocation2 [shape = 'bf16[16,32]{1,0:T(8,128)(2,1)}', space=vmem, size = 0x1000, scoped, tag = 'scratch operand']
  #allocation3 [shape = 'f32[1,64]{1,0:T(1,128)}', space=vmem, size = 0x200, scoped, tag = 'scratch operand']
  %s0 = inlined_call_operand.vmem [shape: bf16[16,8], index: 0, kind: input, shape index: {}]
  %s1 = inlined_call_operand.vmem [shape: bf16[16,16], index: 1, kind: input, shape index: {}]
  %s2 = inlined_call_operand.hbm [shape: f32[1,8], index: 2, kind: input, shape index: {}]
  %s3 = inlined_call_operand.vmem [shape: f32[8,32], index: 3, kind: input, shape index: {}]
  %s4 = inlined_call_operand.hbm [shape: f32[1,32], index: 4, kind: input, shape index: {}]
  %s5 = inlined_call_operand.hbm [shape: f32[32,64], index: 5, kind: input, shape index: {}]
  %s6 = inlined_call_operand.hbm [shape: f32[1,64], index: 6, kind: input, shape index: {}]
  %s7 = inlined_call_operand.vmem [shape: f32[8,32], index: 7, kind: input, shape index: {}]
  %s8 = inlined_call_operand.vmem [shape: f32[1,32], index: 8, kind: input, shape index: {}]
  %s9 = inlined_call_operand.hbm [shape: f32[96,128], index: 9, kind: input, shape index: {}]
  %s10 = inlined_call_operand.vmem [shape: f32[1,128], index: 10, kind: input, shape index: {}]
  %s11 = inlined_call_operand.hbm [shape: f32[1,128], index: 11, kind: output, shape index: {}]
  %s12 = sld [smem:[#allocation0]]
  $region113: #{tpu_custom_call.1} parent=0
    _
  %s14 = ssub.s32 1, %s12
  %s15 = scalar_select 0, %s14, %s12
  $region1: #{tpu_custom_call.1} parent=0
    #allocation4 [shape = 'u8[512]{0}', space=vmem, size = 0x400, scoped, tag = 'input window, operand 2, single buffered']
    #allocation5 [shape = 's32[2]{0}', space=sflag, size = 0x8, scoped, tag = 'scoped memory for tpu_custom_call.1']
    #allocation6 [shape = 's32[2]{0}', space=sflag, size = 0x8, scoped, tag = 'scoped memory for tpu_custom_call.1']
    #allocation7 [shape = 'u8[512]{0}', space=vmem, size = 0x400, scoped, tag = 'input window, operand 4, single buffered']
    #allocation8 [shape = 's32[1]{0}', space=sflag, size = 0x4, scoped, tag = 'scoped memory for tpu_custom_call.1']
    #allocation9 [shape = 'u8[16384]{0}', space=vmem, size = 0x4000, scoped, tag = 'input window, operand 5, single buffered']
    #allocation10 [shape = 'u8[512]{0}', space=vmem, size = 0x400, scoped, tag = 'input window, operand 6, single buffered']
    #allocation11 [shape = 's32[1]{0}', space=sflag, size = 0x4, scoped, tag = 'scoped memory for tpu_custom_call.1']
    #allocation12 [shape = 'u8[49152]{0}', space=vmem, size = 0xc000, scoped, tag = 'input window, operand 9, single buffered']
    #allocation13 [shape = 'u8[512]{0}', space=vmem, size = 0x400, scoped, tag = 'output window, operand 0, single buffered']
    %16 = vsyncpa [#allocation5], 0
    %17 = vsyncpa [#allocation8], 0
    %18 = vsyncpa [#allocation11], 0
    %19 = vsyncpa [#allocation6], 0
    loop: start=0, step=1, limit=4
    $region2: #{tpu_custom_call.1} parent=1 // loop_pre_header
      _
    $region3: #{tpu_custom_call.1} parent=1 // loop_header
      %s21 = sphi 0, %s25
      %p22 = scmp.ge.s32.totalorder %s21, 4
      %s28 = sphi 0, %s40
      %s29 = sphi 0, %s36
      %s30 = sphi 0, %s28
      %s31 = sphi 0, %s29
      %s32 = sphi 0, %s30
      %s33 = sphi 0, %s31
      %s41 = sphi 0, %s41
      %s43 = sphi 0, %s41
      %s44 = sphi 0, %s43
      %s58 = sphi 0, %s44
      %s64 = sphi 0, %s66
      %s67 = sphi 0, %s64
      %s68 = sphi 0, %s67
      %s84 = sphi 0, %s68
      %s88 = sphi 0, %s88
      %s90 = sphi 0, %s88
      %s91 = sphi 0, %s90
      %s105 = sphi 0, %s91
      %s109 = sphi 0, %s109
      %s111 = sphi 0, %s109
      %s112 = sphi 0, %s111
      %s126 = sphi 0, %s112
      %s130 = sphi 0, %s130
      %s132 = sphi 0, %s130
      %s133 = sphi 0, %s132
      %s147 = sphi 0, %s133
      %s151 = sphi 0, %s151
      %s153 = sphi 0, %s151
      %s154 = sphi 0, %s153
      %s168 = sphi 0, %s154
      %s172 = sphi 0, %s172
      %s174 = sphi 0, %s172
      %s175 = sphi 0, %s174
      %s189 = sphi 0, %s175
      %s193 = sphi 0, %s193
      %s195 = sphi 0, %s193
      %s196 = sphi 0, %s195
      %s210 = sphi 0, %s196
      %s214 = sphi 0, %s214
      %s216 = sphi 0, %s214
      %s217 = sphi 0, %s216
      %s231 = sphi 0, %s217
      %s235 = sphi 0, %s235
      %s237 = sphi 0, %s235
      %s238 = sphi 0, %s237
      %s252 = sphi 0, %s238
      %s256 = sphi 0, %s256
      %s258 = sphi 0, %s256
      %s259 = sphi 0, %s258
      %s273 = sphi 0, %s259
      %s277 = sphi 0, %s277
      %s279 = sphi 0, %s277
      %s280 = sphi 0, %s279
      %s294 = sphi 0, %s280
    $region4: #{tpu_custom_call.1} parent=1 // loop_header_branch
      %24 = sbr.rel (%p22) target = $region8
    $region5: #{tpu_custom_call.1} parent=1 // loop_body
      %s26 = ssub.s32 %s21, 1
      %s27 = ssub.s32 %s21, 2
      %s34 = sadd.s32 1, %s29
      %p35 = scmp.ge.s32.totalorder %s34, 1
      %s36 = scalar_select %p35, 0, %s34
      %s37 = sadd.s32 1, %s28
      %s38 = scalar_select %p35, %s37, %s28
      %p39 = scmp.ge.s32.totalorder %s38, 2
      %s40 = scalar_select %p39, 0, %s38
      %s42 = sadd.s32 %s41, 1
      %p45 = scmp.eq.s32.totalorder %s21, 1
      %p46 = scmp.ne.s32.totalorder %s41, %s43
      %p47 = scmp.eq.s32.totalorder %s21, 0
      %p48 = por %p46, %p47
      %p49 = scmp.ne.s32.totalorder %s41, %s43
      %p50 = scmp.eq.s32.totalorder %s26, 1
      %p51 = por %p49, %p50
      %p52 = scmp.ne.s32.totalorder %s43, %s44
      %p53 = scmp.eq.s32.totalorder %s26, 0
      %p54 = por %p52, %p53
      %p55 = scmp.ne.s32.totalorder %s43, %s44
      %p56 = scmp.eq.s32.totalorder %s27, 1
      %p57 = por %p55, %p56
      %p59 = scmp.ne.s32.totalorder %s44, %s58
      %p60 = scmp.eq.s32.totalorder %s27, 0
      %p61 = por %p59, %p60
      %s62 = ssub.s32 %s29, %s36
      %p63 = scmp.eq.s32.totalorder %s62, 0
      %s65 = sadd.s32 %s64, 1
      %s66 = scalar_select %p63, %s64, %s65
      %p69 = pneg %p63
      %p70 = scmp.eq.s32.totalorder %s21, 1
      %p71 = por %p69, %p70
      %p72 = scmp.ne.s32.totalorder %s64, %s67
      %p73 = scmp.eq.s32.totalorder %s21, 0
      %p74 = por %p72, %p73
      %p75 = scmp.ne.s32.totalorder %s64, %s67
      %p76 = scmp.eq.s32.totalorder %s26, 1
      %p77 = por %p75, %p76
      %p78 = scmp.ne.s32.totalorder %s67, %s68
      %p79 = scmp.eq.s32.totalorder %s26, 0
      %p80 = por %p78, %p79
      %p81 = scmp.ne.s32.totalorder %s67, %s68
      %p82 = scmp.eq.s32.totalorder %s27, 1
      %p83 = por %p81, %p82
      %p85 = scmp.ne.s32.totalorder %s68, %s84
      %p86 = scmp.eq.s32.totalorder %s27, 0
      %p87 = por %p85, %p86
      %s89 = sadd.s32 %s88, 1
      %p92 = scmp.eq.s32.totalorder %s21, 1
      %p93 = scmp.ne.s32.totalorder %s88, %s90
      %p94 = scmp.eq.s32.totalorder %s21, 0
      %p95 = por %p93, %p94
      %p96 = scmp.ne.s32.totalorder %s88, %s90
      %p97 = scmp.eq.s32.totalorder %s26, 1
      %p98 = por %p96, %p97
      %p99 = scmp.ne.s32.totalorder %s90, %s91
      %p100 = scmp.eq.s32.totalorder %s26, 0
      %p101 = por %p99, %p100
      %p102 = scmp.ne.s32.totalorder %s90, %s91
      %p103 = scmp.eq.s32.totalorder %s27, 1
      %p104 = por %p102, %p103
      %p106 = scmp.ne.s32.totalorder %s91, %s105
      %p107 = scmp.eq.s32.totalorder %s27, 0
      %p108 = por %p106, %p107
      %s110 = sadd.s32 %s109, 1
      %p113 = scmp.eq.s32.totalorder %s21, 1
      %p114 = scmp.ne.s32.totalorder %s109, %s111
      %p115 = scmp.eq.s32.totalorder %s21, 0
      %p116 = por %p114, %p115
      %p117 = scmp.ne.s32.totalorder %s109, %s111
      %p118 = scmp.eq.s32.totalorder %s26, 1
      %p119 = por %p117, %p118
      %p120 = scmp.ne.s32.totalorder %s111, %s112
      %p121 = scmp.eq.s32.totalorder %s26, 0
      %p122 = por %p120, %p121
      %p123 = scmp.ne.s32.totalorder %s111, %s112
      %p124 = scmp.eq.s32.totalorder %s27, 1
      %p125 = por %p123, %p124
      %p127 = scmp.ne.s32.totalorder %s112, %s126
      %p128 = scmp.eq.s32.totalorder %s27, 0
      %p129 = por %p127, %p128
      %s131 = sadd.s32 %s130, 1
      %p134 = scmp.eq.s32.totalorder %s21, 1
      %p135 = scmp.ne.s32.totalorder %s130, %s132
      %p136 = scmp.eq.s32.totalorder %s21, 0
      %p137 = por %p135, %p136
      %p138 = scmp.ne.s32.totalorder %s130, %s132
      %p139 = scmp.eq.s32.totalorder %s26, 1
      %p140 = por %p138, %p139
      %p141 = scmp.ne.s32.totalorder %s132, %s133
      %p142 = scmp.eq.s32.totalorder %s26, 0
      %p143 = por %p141, %p142
      %p144 = scmp.ne.s32.totalorder %s132, %s133
      %p145 = scmp.eq.s32.totalorder %s27, 1
      %p146 = por %p144, %p145
      %p148 = scmp.ne.s32.totalorder %s133, %s147
      %p149 = scmp.eq.s32.totalorder %s27, 0
      %p150 = por %p148, %p149
      %s152 = sadd.s32 %s151, 1
      %p155 = scmp.eq.s32.totalorder %s21, 1
      %p156 = scmp.ne.s32.totalorder %s151, %s153
      %p157 = scmp.eq.s32.totalorder %s21, 0
      %p158 = por %p156, %p157
      %p159 = scmp.ne.s32.totalorder %s151, %s153
      %p160 = scmp.eq.s32.totalorder %s26, 1
      %p161 = por %p159, %p160
      %p162 = scmp.ne.s32.totalorder %s153, %s154
      %p163 = scmp.eq.s32.totalorder %s26, 0
      %p164 = por %p162, %p163
      %p165 = scmp.ne.s32.totalorder %s153, %s154
      %p166 = scmp.eq.s32.totalorder %s27, 1
      %p167 = por %p165, %p166
      %p169 = scmp.ne.s32.totalorder %s154, %s168
      %p170 = scmp.eq.s32.totalorder %s27, 0
      %p171 = por %p169, %p170
      %s173 = sadd.s32 %s172, 1
      %p176 = scmp.eq.s32.totalorder %s21, 1
      %p177 = scmp.ne.s32.totalorder %s172, %s174
      %p178 = scmp.eq.s32.totalorder %s21, 0
      %p179 = por %p177, %p178
      %p180 = scmp.ne.s32.totalorder %s172, %s174
      %p181 = scmp.eq.s32.totalorder %s26, 1
      %p182 = por %p180, %p181
      %p183 = scmp.ne.s32.totalorder %s174, %s175
      %p184 = scmp.eq.s32.totalorder %s26, 0
      %p185 = por %p183, %p184
      %p186 = scmp.ne.s32.totalorder %s174, %s175
      %p187 = scmp.eq.s32.totalorder %s27, 1
      %p188 = por %p186, %p187
      %p190 = scmp.ne.s32.totalorder %s175, %s189
      %p191 = scmp.eq.s32.totalorder %s27, 0
      %p192 = por %p190, %p191
      %s194 = sadd.s32 %s193, 1
      %p197 = scmp.eq.s32.totalorder %s21, 1
      %p198 = scmp.ne.s32.totalorder %s193, %s195
      %p199 = scmp.eq.s32.totalorder %s21, 0
      %p200 = por %p198, %p199
      %p201 = scmp.ne.s32.totalorder %s193, %s195
      %p202 = scmp.eq.s32.totalorder %s26, 1
      %p203 = por %p201, %p202
      %p204 = scmp.ne.s32.totalorder %s195, %s196
      %p205 = scmp.eq.s32.totalorder %s26, 0
      %p206 = por %p204, %p205
      %p207 = scmp.ne.s32.totalorder %s195, %s196
      %p208 = scmp.eq.s32.totalorder %s27, 1
      %p209 = por %p207, %p208
      %p211 = scmp.ne.s32.totalorder %s196, %s210
      %p212 = scmp.eq.s32.totalorder %s27, 0
      %p213 = por %p211, %p212
      %s215 = sadd.s32 %s214, 1
      %p218 = scmp.eq.s32.totalorder %s21, 1
      %p219 = scmp.ne.s32.totalorder %s214, %s216
      %p220 = scmp.eq.s32.totalorder %s21, 0
      %p221 = por %p219, %p220
      %p222 = scmp.ne.s32.totalorder %s214, %s216
      %p223 = scmp.eq.s32.totalorder %s26, 1
      %p224 = por %p222, %p223
      %p225 = scmp.ne.s32.totalorder %s216, %s217
      %p226 = scmp.eq.s32.totalorder %s26, 0
      %p227 = por %p225, %p226
      %p228 = scmp.ne.s32.totalorder %s216, %s217
      %p229 = scmp.eq.s32.totalorder %s27, 1
      %p230 = por %p228, %p229
      %p232 = scmp.ne.s32.totalorder %s217, %s231
      %p233 = scmp.eq.s32.totalorder %s27, 0
      %p234 = por %p232, %p233
      %s236 = sadd.s32 %s235, 1
      %p239 = scmp.eq.s32.totalorder %s21, 1
      %p240 = scmp.ne.s32.totalorder %s235, %s237
      %p241 = scmp.eq.s32.totalorder %s21, 0
      %p242 = por %p240, %p241
      %p243 = scmp.ne.s32.totalorder %s235, %s237
      %p244 = scmp.eq.s32.totalorder %s26, 1
      %p245 = por %p243, %p244
      %p246 = scmp.ne.s32.totalorder %s237, %s238
      %p247 = scmp.eq.s32.totalorder %s26, 0
      %p248 = por %p246, %p247
      %p249 = scmp.ne.s32.totalorder %s237, %s238
      %p250 = scmp.eq.s32.totalorder %s27, 1
      %p251 = por %p249, %p250
      %p253 = scmp.ne.s32.totalorder %s238, %s252
      %p254 = scmp.eq.s32.totalorder %s27, 0
      %p255 = por %p253, %p254
      %s257 = sadd.s32 %s256, 1
      %p260 = scmp.eq.s32.totalorder %s21, 1
      %p261 = scmp.ne.s32.totalorder %s256, %s258
      %p262 = scmp.eq.s32.totalorder %s21, 0
      %p263 = por %p261, %p262
      %p264 = scmp.ne.s32.totalorder %s256, %s258
      %p265 = scmp.eq.s32.totalorder %s26, 1
      %p266 = por %p264, %p265
      %p267 = scmp.ne.s32.totalorder %s258, %s259
      %p268 = scmp.eq.s32.totalorder %s26, 0
      %p269 = por %p267, %p268
      %p270 = scmp.ne.s32.totalorder %s258, %s259
      %p271 = scmp.eq.s32.totalorder %s27, 1
      %p272 = por %p270, %p271
      %p274 = scmp.ne.s32.totalorder %s259, %s273
      %p275 = scmp.eq.s32.totalorder %s27, 0
      %p276 = por %p274, %p275
      %s278 = sadd.s32 %s277, 1
      %p281 = scmp.eq.s32.totalorder %s21, 1
      %p282 = scmp.ne.s32.totalorder %s277, %s279
      %p283 = scmp.eq.s32.totalorder %s21, 0
      %p284 = por %p282, %p283
      %p285 = scmp.ne.s32.totalorder %s277, %s279
      %p286 = scmp.eq.s32.totalorder %s26, 1
      %p287 = por %p285, %p286
      %p288 = scmp.ne.s32.totalorder %s279, %s280
      %p289 = scmp.eq.s32.totalorder %s26, 0
      %p290 = por %p288, %p289
      %p291 = scmp.ne.s32.totalorder %s279, %s280
      %p292 = scmp.eq.s32.totalorder %s27, 1
      %p293 = por %p291, %p292
      %p295 = scmp.ne.s32.totalorder %s280, %s294
      %p296 = scmp.eq.s32.totalorder %s27, 0
      %p297 = por %p295, %p296
      %p298 = scmp.le.s32.totalorder 1, %s21
      %p299 = scmp.lt.s32.totalorder %s21, 3
      %p300 = pnand %p298, %p299
      %p301 = pneg %p300
      // Predicated region
      $region9: #{tpu_custom_call.1} parent=5 // pred_check
        _
      $region10: #{tpu_custom_call.1} parent=5 // pred_check_branch
        %303 = sbr.rel (%p300) target = $region12
      $region11: #{tpu_custom_call.1} parent=5 // pred_region
        %s304 = ssub.s32 %s21, 1
        // Predicated region
        $region13: #{tpu_custom_call.1} parent=11 // pred_check
          %p305 = pneg %p54
        $region14: #{tpu_custom_call.1} parent=11 // pred_check_branch
          %307 = sbr.rel (%p305) target = $region16
        $region15: #{tpu_custom_call.1} parent=11 // pred_region
          _
        $region16: #{tpu_custom_call.1} parent=11 // pred_fallthru
          _
        // Predicated region
        $region17: #{tpu_custom_call.1} parent=11 // pred_check
          %p308 = pneg %p80
        $region18: #{tpu_custom_call.1} parent=11 // pred_check_branch
          %310 = sbr.rel (%p308) target = $region20
        $region19: #{tpu_custom_call.1} parent=11 // pred_region
          %s311 = smul.u32 2, %s31
          %p312 = scmp.lt.s32.totalorder %s311, 1
          %s313 = scalar_select %p312, %s311, 1
          %s314 = smul.addr %s313, 4
          %s315 = scalar_lea.vmem %s1, %s314
          %s316 = smul.u32 2, %s31
        $region20: #{tpu_custom_call.1} parent=11 // pred_fallthru
          _
        // Predicated region
        $region21: #{tpu_custom_call.1} parent=11 // pred_check
          %p317 = pneg %p101
        $region22: #{tpu_custom_call.1} parent=11 // pred_check_branch
          %319 = sbr.rel (%p317) target = $region24
        $region23: #{tpu_custom_call.1} parent=11 // pred_region
          %s321 = ssub.s32 16, 16
          %322 = vsyncadd [#allocation5], %s321
          %s324 = sshll.u32 [#allocation4], 4
          %s325 = int_to_ptr.vmem [resolvable:$true] %s324
          %327 = dma.hbm_to_vmem [thread:$0]  %s2, 16, %s325, [#allocation5]
        $region24: #{tpu_custom_call.1} parent=11 // pred_fallthru
          _
        // Predicated region
        $region25: #{tpu_custom_call.1} parent=11 // pred_check
          %p328 = pneg %p122
        $region26: #{tpu_custom_call.1} parent=11 // pred_check_branch
          %330 = sbr.rel (%p328) target = $region28
        $region27: #{tpu_custom_call.1} parent=11 // pred_region
          _
        $region28: #{tpu_custom_call.1} parent=11 // pred_fallthru
          _
        // Predicated region
        $region29: #{tpu_custom_call.1} parent=11 // pred_check
          %p331 = pneg %p143
        $region30: #{tpu_custom_call.1} parent=11 // pred_check_branch
          %333 = sbr.rel (%p331) target = $region32
        $region31: #{tpu_custom_call.1} parent=11 // pred_region
          %s335 = ssub.s32 16, 16
          %336 = vsyncadd [#allocation8], %s335
          %s338 = sshll.u32 [#allocation7], 4
          %s339 = int_to_ptr.vmem [resolvable:$true] %s338
          %341 = dma.hbm_to_vmem [thread:$0]  %s4, 16, %s339, [#allocation8]
        $region32: #{tpu_custom_call.1} parent=11 // pred_fallthru
          _
        // Predicated region
        $region33: #{tpu_custom_call.1} parent=11 // pred_check
          %p342 = pneg %p164
        $region34: #{tpu_custom_call.1} parent=11 // pred_check_branch
          %344 = sbr.rel (%p342) target = $region36
        $region35: #{tpu_custom_call.1} parent=11 // pred_region
          %s346 = ssub.s32 512, 512
          %347 = vsyncadd [#allocation8], %s346
          %s348 = sshll.u32 [#allocation9], 4
          %s349 = int_to_ptr.vmem [resolvable:$true] %s348
          %354 = dma.hbm_to_vmem [thread:$0]  %s5, 512, %s349, [#allocation8], 128, 128, 8
        $region36: #{tpu_custom_call.1} parent=11 // pred_fallthru
          _
        // Predicated region
        $region37: #{tpu_custom_call.1} parent=11 // pred_check
          %p355 = pneg %p185
        $region38: #{tpu_custom_call.1} parent=11 // pred_check_branch
          %357 = sbr.rel (%p355) target = $region40
        $region39: #{tpu_custom_call.1} parent=11 // pred_region
          %s359 = ssub.s32 16, 16
          %360 = vsyncadd [#allocation11], %s359
          %s362 = sshll.u32 [#allocation10], 4
          %s363 = int_to_ptr.vmem [resolvable:$true] %s362
          %365 = dma.hbm_to_vmem [thread:$0]  %s6, 16, %s363, [#allocation11]
        $region40: #{tpu_custom_call.1} parent=11 // pred_fallthru
          _
        // Predicated region
        $region41: #{tpu_custom_call.1} parent=11 // pred_check
          %p366 = pneg %p206
        $region42: #{tpu_custom_call.1} parent=11 // pred_check_branch
          %368 = sbr.rel (%p366) target = $region44
        $region43: #{tpu_custom_call.1} parent=11 // pred_region
          _
        $region44: #{tpu_custom_call.1} parent=11 // pred_fallthru
          _
        // Predicated region
        $region45: #{tpu_custom_call.1} parent=11 // pred_check
          %p369 = pneg %p227
        $region46: #{tpu_custom_call.1} parent=11 // pred_check_branch
          %371 = sbr.rel (%p369) target = $region48
        $region47: #{tpu_custom_call.1} parent=11 // pred_region
          _
        $region48: #{tpu_custom_call.1} parent=11 // pred_fallthru
          _
        // Predicated region
        $region49: #{tpu_custom_call.1} parent=11 // pred_check
          %p372 = pneg %p248
        $region50: #{tpu_custom_call.1} parent=11 // pred_check_branch
          %374 = sbr.rel (%p372) target = $region52
        $region51: #{tpu_custom_call.1} parent=11 // pred_region
          %s376 = ssub.s32 1536, 1536
          %377 = vsyncadd [#allocation11], %s376
          %s378 = sshll.u32 [#allocation12], 4
          %s379 = int_to_ptr.vmem [resolvable:$true] %s378
          %384 = dma.hbm_to_vmem [thread:$0]  %s9, 1536, %s379, [#allocation11], 128, 128, 8
        $region52: #{tpu_custom_call.1} parent=11 // pred_fallthru
          _
        // Predicated region
        $region53: #{tpu_custom_call.1} parent=11 // pred_check
          %p385 = pneg %p269
        $region54: #{tpu_custom_call.1} parent=11 // pred_check_branch
          %387 = sbr.rel (%p385) target = $region56
        $region55: #{tpu_custom_call.1} parent=11 // pred_region
          _
        $region56: #{tpu_custom_call.1} parent=11 // pred_fallthru
          _
      $region12: #{tpu_custom_call.1} parent=5 // pred_fallthru
        _
      %p388 = scmp.lt.s32.totalorder %s21, 2
      // Predicated region
      $region57: #{tpu_custom_call.1} parent=5 // pred_check
        %p389 = pneg %p388
      $region58: #{tpu_custom_call.1} parent=5 // pred_check_branch
        %391 = sbr.rel (%p389) target = $region60
      $region59: #{tpu_custom_call.1} parent=5 // pred_region
        _
      $region60: #{tpu_custom_call.1} parent=5 // pred_fallthru
        _
      %p392 = scmp.le.s32.totalorder 1, %s21
      %p393 = scmp.lt.s32.totalorder %s21, 3
      %p394 = pnand %p392, %p393
      %p395 = pneg %p394
      // Predicated region
      $region61: #{tpu_custom_call.1} parent=5 // pred_check
        _
      $region62: #{tpu_custom_call.1} parent=5 // pred_check_branch
        %397 = sbr.rel (%p394) target = $region64
      $region63: #{tpu_custom_call.1} parent=5 // pred_region
        %s398 = ssub.s32 %s21, 1
        // Predicated region
        $region65: #{tpu_custom_call.1} parent=63 // pred_check
          %p399 = pneg %p101
        $region66: #{tpu_custom_call.1} parent=63 // pred_check_branch
          %401 = sbr.rel (%p399) target = $region68
        $region67: #{tpu_custom_call.1} parent=63 // pred_region
          %402 = dma.done [#allocation5], 16
        $region68: #{tpu_custom_call.1} parent=63 // pred_fallthru
          _
        // Predicated region
        $region69: #{tpu_custom_call.1} parent=63 // pred_check
          %p403 = pneg %p143
        $region70: #{tpu_custom_call.1} parent=63 // pred_check_branch
          %405 = sbr.rel (%p403) target = $region72
        $region71: #{tpu_custom_call.1} parent=63 // pred_region
          %406 = dma.done [#allocation8], 16
        $region72: #{tpu_custom_call.1} parent=63 // pred_fallthru
          _
        // Predicated region
        $region73: #{tpu_custom_call.1} parent=63 // pred_check
          %p407 = pneg %p164
        $region74: #{tpu_custom_call.1} parent=63 // pred_check_branch
          %409 = sbr.rel (%p407) target = $region76
        $region75: #{tpu_custom_call.1} parent=63 // pred_region
          %410 = dma.done [#allocation8], 512
        $region76: #{tpu_custom_call.1} parent=63 // pred_fallthru
          _
        // Predicated region
        $region77: #{tpu_custom_call.1} parent=63 // pred_check
          %p411 = pneg %p185
        $region78: #{tpu_custom_call.1} parent=63 // pred_check_branch
          %413 = sbr.rel (%p411) target = $region80
        $region79: #{tpu_custom_call.1} parent=63 // pred_region
          %414 = dma.done [#allocation11], 16
        $region80: #{tpu_custom_call.1} parent=63 // pred_fallthru
          _
        // Predicated region
        $region81: #{tpu_custom_call.1} parent=63 // pred_check
          %p415 = pneg %p248
        $region82: #{tpu_custom_call.1} parent=63 // pred_check_branch
          %417 = sbr.rel (%p415) target = $region84
        $region83: #{tpu_custom_call.1} parent=63 // pred_region
          %418 = dma.done [#allocation11], 1536
        $region84: #{tpu_custom_call.1} parent=63 // pred_fallthru
          _
        %p419 = pneg %p54
        %p420 = pneg %p51
        %s421 = smul.u32 2, %s31
        %p422 = scmp.lt.s32.totalorder %s421, 1
        %s423 = scalar_select %p422, %s421, 1
        %s424 = smul.addr %s423, 4
        %s425 = scalar_lea.vmem %s1, %s424
        %p426 = pneg %p80
        %p427 = pneg %p77
        %p428 = pneg %p101
        %p429 = pneg %p98
        %p430 = pneg %p122
        %p431 = pneg %p119
        %p432 = pneg %p143
        %p433 = pneg %p140
        %p434 = pneg %p164
        %p435 = pneg %p161
        %p436 = pneg %p185
        %p437 = pneg %p182
        %p438 = pneg %p206
        %p439 = pneg %p203
        %p440 = pneg %p227
        %p441 = pneg %p224
        %p442 = pneg %p248
        %p443 = pneg %p245
        %p444 = pneg %p269
        %p445 = pneg %p266
        %p446 = pneg %p290
        %p447 = pneg %p287
        %s448 = smul.u32 2, %s31
        %p449 = scmp.lt.s32.totalorder %s448, 1
        %s450 = scalar_select %p449, %s448, 1
        %s451 = smul.addr %s450, 4
        %s452 = scalar_lea.vmem %s1, %s451
        %s453 = smul.u32 2, %s31
        %s455 = smul.u32 %s31, 16
        %p456 = scmp.eq.s32.totalorder %s30, 0
        // Predicated region
        $region85: #{tpu_custom_call.1} parent=63 // pred_check
          %p457 = pneg %p456
        $region86: #{tpu_custom_call.1} parent=63 // pred_check_branch
          %459 = sbr.rel (%p457) target = $region88
        $region87: #{tpu_custom_call.1} parent=63 // pred_region
          %v460 = vld [vmem:[%s452] sm:$0xf]
          %v461 = vld [vmem:[%s452 + $0x4] sm:$0xf]
          %v462 = vld [vmem:[%s0] sm:$0xf]
          %v463 = vld [vmem:[%s0 + $0x4] sm:$0xf]
          %v466 = vunpack.c.l.b16 %v460
          %v467 = vunpack.c.l.b16 %v461
          %v468 = vpack.c.b16 %v467, %v466
          %v471 = vunpack.c.l.b16 %v462
          %v472 = vunpack.c.l.b16 %v463
          %v473 = vpack.c.b16 %v472, %v471
          %vm475 = vcmask 130048
          %v477 = vsel %vm475, %v468, 0
          %479 = vmatprep.subr.bf16.mxu0 0
          %480 = vmatpush1.bf16.msra.mxu0 0
          %481 = vmatprep.subr.bf16.mxu0 0
          %482 = vmatpush1.bf16.msra.mxu0 0
          %483 = vmatprep.subr.bf16.mxu0 0
          %484 = vmatpush1.bf16.msra.mxu0 0
          %485 = vmatprep.subr.bf16.mxu0 0
          %486 = vmatpush1.bf16.msra.mxu0 0
          %487 = vmatprep.subr.bf16.mxu0 0
          %488 = vmatpush1.bf16.msra.mxu0 0
          %489 = vmatprep.subr.bf16.mxu0 0
          %490 = vmatpush1.bf16.msra.mxu0 0
          %491 = vmatprep.subr.bf16.mxu0 0
          %492 = vmatpush1.bf16.msra.mxu0 0
          %493 = vmatprep.subr.bf16.mxu0 0
          %494 = vmatpush1.bf16.msra.mxu0 %v473
          %495 = vmatprep.subr.bf16.mxu0 0
          %496 = vmatpush2.bf16.msra.mxu0 0
          %497 = vmatprep.subr.bf16.mxu0 0
          %498 = vmatpush2.bf16.msra.mxu0 0
          %499 = vmatprep.subr.bf16.mxu0 0
          %500 = vmatpush2.bf16.msra.mxu0 0
          %501 = vmatprep.subr.bf16.mxu0 0
          %502 = vmatpush2.bf16.msra.mxu0 0
          %503 = vmatprep.subr.bf16.mxu0 0
          %504 = vmatpush2.bf16.msra.mxu0 0
          %505 = vmatprep.subr.bf16.mxu0 0
          %506 = vmatpush2.bf16.msra.mxu0 0
          %507 = vmatprep.subr.bf16.mxu0 0
          %508 = vmatpush2.bf16.msra.mxu0 0
          %509 = vmatprep.subr.bf16.mxu0 0
          %510 = vmatpush2.bf16.msra.mxu0 0
          %511 = vmatprep.mubr.bf16.mxu0 0
          %512 = vmatmul.mubr.bf16.gmra.mxu0 %v477
          %v513 = vpop.f32.mrf.mxu0
          %v514 = vadd.f32 0.0, %v513
          %v515 = vpop.f32.mrf.mxu0
          %v516 = vpop.f32.mrf.mxu0
          %v517 = vadd.f32 0.0, %v516
          %v518 = vpop.f32.mrf.mxu0
          %519 = vdwg.mxu0
          %v520 = vld [vmem:[%s3] sm:$0xff]
          %v521 = vld [vmem:[#allocation7] sm:$0x1]
          %v523 = vlaneseq
          %v524 = vshrl.u32 %v523, 7
          %v525 = vsub.s32 0, %v524
          %v526 = vrot.slane %v521, %v525
          %vm528 = vcmask 64512
          %v530 = vsel %vm528, %v514, 0
          %v533 = vsel %vm528, %v517, 0
          %535 = vmatprep.subr.mxu0 0.0
          %536 = vmatpush1.msra.mxu0 0.0
          %537 = vmatprep.subr.mxu0 0.0
          %538 = vmatpush1.msra.mxu0 0.0
          %539 = vmatprep.subr.mxu0 0.0
          %540 = vmatpush1.msra.mxu0 0.0
          %541 = vmatprep.subr.mxu0 0.0
          %542 = vmatpush1.msra.mxu0 0.0
          %543 = vmatprep.subr.mxu0 0.0
          %544 = vmatpush1.msra.mxu0 0.0
          %545 = vmatprep.subr.mxu0 0.0
          %546 = vmatpush1.msra.mxu0 0.0
          %547 = vmatprep.subr.mxu0 0.0
          %548 = vmatpush1.msra.mxu0 0.0
          %549 = vmatprep.subr.mxu0 0.0
          %550 = vmatpush1.msra.mxu0 0.0
          %551 = vmatprep.subr.mxu0 0.0
          %552 = vmatpush1.msra.mxu0 0.0
          %553 = vmatprep.subr.mxu0 0.0
          %554 = vmatpush1.msra.mxu0 0.0
          %555 = vmatprep.subr.mxu0 0.0
          %556 = vmatpush1.msra.mxu0 0.0
          %557 = vmatprep.subr.mxu0 0.0
          %558 = vmatpush1.msra.mxu0 0.0
          %559 = vmatprep.subr.mxu0 0.0
          %560 = vmatpush1.msra.mxu0 0.0
          %561 = vmatprep.subr.mxu0 0.0
          %562 = vmatpush1.msra.mxu0 0.0
          %563 = vmatprep.subr.mxu0 0.0
          %564 = vmatpush1.msra.mxu0 0.0
          %565 = vmatprep.subr.mxu0 0.0
          %566 = vmatpush1.msra.mxu0 %v520
          %567 = vmatprep.subr.mxu0 0.0
          %568 = vmatpush2.msra.mxu0 0.0
          %569 = vmatprep.subr.mxu0 0.0
          %570 = vmatpush2.msra.mxu0 0.0
          %571 = vmatprep.subr.mxu0 0.0
          %572 = vmatpush2.msra.mxu0 0.0
          %573 = vmatprep.subr.mxu0 0.0
          %574 = vmatpush2.msra.mxu0 0.0
          %575 = vmatprep.subr.mxu0 0.0
          %576 = vmatpush2.msra.mxu0 0.0
          %577 = vmatprep.subr.mxu0 0.0
          %578 = vmatpush2.msra.mxu0 0.0
          %579 = vmatprep.subr.mxu0 0.0
          %580 = vmatpush2.msra.mxu0 0.0
          %581 = vmatprep.subr.mxu0 0.0
          %582 = vmatpush2.msra.mxu0 0.0
          %583 = vmatprep.subr.mxu0 0.0
          %584 = vmatpush2.msra.mxu0 0.0
          %585 = vmatprep.subr.mxu0 0.0
          %586 = vmatpush2.msra.mxu0 0.0
          %587 = vmatprep.subr.mxu0 0.0
          %588 = vmatpush2.msra.mxu0 0.0
          %589 = vmatprep.subr.mxu0 0.0
          %590 = vmatpush2.msra.mxu0 0.0
          %591 = vmatprep.subr.mxu0 0.0
          %592 = vmatpush2.msra.mxu0 0.0
          %593 = vmatprep.subr.mxu0 0.0
          %594 = vmatpush2.msra.mxu0 0.0
          %595 = vmatprep.subr.mxu0 0.0
          %596 = vmatpush2.msra.mxu0 0.0
          %597 = vmatprep.subr.mxu0 0.0
          %598 = vmatpush2.msra.mxu0 0.0
          %599 = vmatprep.mubr.f32.mxu0 0.0
          %600 = vmatmul.mubr.f32.gmra.mxu0 %v530
          %v601 = vpop.f32.mrf.mxu0
          %v602 = vadd.f32 %v526, %v601
          %v603 = vpop.f32.mrf.mxu0
          %604 = vmatprep.mubr.f32.mxu0 0.0
          %605 = vmatmul.mubr.f32.gmra.mxu0 %v533
          %v606 = vpop.f32.mrf.mxu0
          %v607 = vadd.f32 %v526, %v606
          %v608 = vpop.f32.mrf.mxu0
          %609 = vdwg.mxu0
          %v610 = vmax.f32 %v602, 0.0
          %v611 = vmax.f32 %v607, 0.0
          %v612 = vpack.c.bf16 %v611, %v610
          %v614 = vunpack.c.l.b16 %v612
          %v615 = vunpack.c.h.b16 %v612
          %v616 = vpack.c.b16 %v614, %v614
          %v617 = vpack.c.b16 %v615, %v615
          %s620 = sshra.s32 %s455, 3
          %s621 = sand.u32 %s455, 7
          %s622 = smul.addr %s620, 4
          %s623 = scalar_lea.vmem [#allocation2], %s622
          %vm624 = vcmask 257024
          %625 = vst.msk [vmem:[%s623] sm:$0xf] %vm624, %v616
          %626 = vst.msk [vmem:[%s623 + $0x4] sm:$0xf] %vm624, %v617
        $region88: #{tpu_custom_call.1} parent=63 // pred_fallthru
          _
        %p627 = scmp.eq.s32.totalorder %s30, 1
        // Predicated region
        $region89: #{tpu_custom_call.1} parent=63 // pred_check
          %p628 = pneg %p627
        $region90: #{tpu_custom_call.1} parent=63 // pred_check_branch
          %630 = sbr.rel (%p628) target = $region92
        $region91: #{tpu_custom_call.1} parent=63 // pred_region
          %p631 = scmp.eq.s32.totalorder %s31, 0
          // Predicated region
          $region93: #{tpu_custom_call.1} parent=91 // pred_check
            %p632 = pneg %p631
          $region94: #{tpu_custom_call.1} parent=91 // pred_check_branch
            %634 = sbr.rel (%p632) target = $region96
          $region95: #{tpu_custom_call.1} parent=91 // pred_region
            %vm635 = vcmask 516096
            %636 = vst.msk [vmem:[#allocation3] sm:$0x1] %vm635, 0.0
          $region96: #{tpu_custom_call.1} parent=91 // pred_fallthru
            _
          %v637 = vld [vmem:[%s452] sm:$0xf]
          %v638 = vld [vmem:[%s452 + $0x4] sm:$0xf]
          %v639 = vld [vmem:[#allocation2] sm:$0xf]
          %v640 = vld [vmem:[#allocation2 + $0x4] sm:$0xf]
          %v643 = vunpack.c.l.b16 %v637
          %v644 = vunpack.c.l.b16 %v638
          %v645 = vpack.c.b16 %v644, %v643
          %v648 = vunpack.c.l.b16 %v639
          %v649 = vunpack.c.l.b16 %v640
          %v650 = vpack.c.b16 %v649, %v648
          %vm652 = vcmask 130048
          %v654 = vsel %vm652, %v645, 0
          %656 = vmatprep.subr.bf16.mxu0 0
          %657 = vmatpush1.bf16.msra.mxu0 0
          %658 = vmatprep.subr.bf16.mxu0 0
          %659 = vmatpush1.bf16.msra.mxu0 0
          %660 = vmatprep.subr.bf16.mxu0 0
          %661 = vmatpush1.bf16.msra.mxu0 0
          %662 = vmatprep.subr.bf16.mxu0 0
          %663 = vmatpush1.bf16.msra.mxu0 0
          %664 = vmatprep.subr.bf16.mxu0 0
          %665 = vmatpush1.bf16.msra.mxu0 0
          %666 = vmatprep.subr.bf16.mxu0 0
          %667 = vmatpush1.bf16.msra.mxu0 0
          %668 = vmatprep.subr.bf16.mxu0 0
          %669 = vmatpush1.bf16.msra.mxu0 0
          %670 = vmatprep.subr.bf16.mxu0 0
          %671 = vmatpush1.bf16.msra.mxu0 %v650
          %672 = vmatprep.subr.bf16.mxu0 0
          %673 = vmatpush2.bf16.msra.mxu0 0
          %674 = vmatprep.subr.bf16.mxu0 0
          %675 = vmatpush2.bf16.msra.mxu0 0
          %676 = vmatprep.subr.bf16.mxu0 0
          %677 = vmatpush2.bf16.msra.mxu0 0
          %678 = vmatprep.subr.bf16.mxu0 0
          %679 = vmatpush2.bf16.msra.mxu0 0
          %680 = vmatprep.subr.bf16.mxu0 0
          %681 = vmatpush2.bf16.msra.mxu0 0
          %682 = vmatprep.subr.bf16.mxu0 0
          %683 = vmatpush2.bf16.msra.mxu0 0
          %684 = vmatprep.subr.bf16.mxu0 0
          %685 = vmatpush2.bf16.msra.mxu0 0
          %686 = vmatprep.subr.bf16.mxu0 0
          %687 = vmatpush2.bf16.msra.mxu0 0
          %688 = vmatprep.mubr.bf16.mxu0 0
          %689 = vmatmul.mubr.bf16.gmra.mxu0 %v654
          %v690 = vpop.f32.mrf.mxu0
          %v691 = vadd.f32 0.0, %v690
          %v692 = vpop.f32.mrf.mxu0
          %v693 = vpop.f32.mrf.mxu0
          %v694 = vadd.f32 0.0, %v693
          %v695 = vpop.f32.mrf.mxu0
          %696 = vdwg.mxu0
          %v697 = vld [vmem:[#allocation9] sm:$0xff]
          %v698 = vld [vmem:[#allocation9 + $0x8] sm:$0xff]
          %v699 = vld [vmem:[#allocation9 + $0x10] sm:$0xff]
          %v700 = vld [vmem:[#allocation9 + $0x18] sm:$0xff]
          %v701 = vld [vmem:[#allocation10] sm:$0x1]
          %v703 = vlaneseq
          %v704 = vshrl.u32 %v703, 7
          %v705 = vsub.s32 0, %v704
          %v706 = vrot.slane %v701, %v705
          %vm708 = vcmask 261120
          %v710 = vsel %vm708, %v691, 0
          %v713 = vsel %vm708, %v694, 0
          %715 = vmatprep.subr.mxu0 0.0
          %716 = vmatpush1.msra.mxu0 0.0
          %717 = vmatprep.subr.mxu0 0.0
          %718 = vmatpush1.msra.mxu0 0.0
          %719 = vmatprep.subr.mxu0 0.0
          %720 = vmatpush1.msra.mxu0 0.0
          %721 = vmatprep.subr.mxu0 0.0
          %722 = vmatpush1.msra.mxu0 0.0
          %723 = vmatprep.subr.mxu0 0.0
          %724 = vmatpush1.msra.mxu0 0.0
          %725 = vmatprep.subr.mxu0 0.0
          %726 = vmatpush1.msra.mxu0 0.0
          %727 = vmatprep.subr.mxu0 0.0
          %728 = vmatpush1.msra.mxu0 0.0
          %729 = vmatprep.subr.mxu0 0.0
          %730 = vmatpush1.msra.mxu0 0.0
          %731 = vmatprep.subr.mxu0 0.0
          %732 = vmatpush1.msra.mxu0 0.0
          %733 = vmatprep.subr.mxu0 0.0
          %734 = vmatpush1.msra.mxu0 0.0
          %735 = vmatprep.subr.mxu0 0.0
          %736 = vmatpush1.msra.mxu0 0.0
          %737 = vmatprep.subr.mxu0 0.0
          %738 = vmatpush1.msra.mxu0 0.0
          %739 = vmatprep.subr.mxu0 0.0
          %740 = vmatpush1.msra.mxu0 %v700
          %741 = vmatprep.subr.mxu0 0.0
          %742 = vmatpush1.msra.mxu0 %v699
          %743 = vmatprep.subr.mxu0 0.0
          %744 = vmatpush1.msra.mxu0 %v698
          %745 = vmatprep.subr.mxu0 0.0
          %746 = vmatpush1.msra.mxu0 %v697
          %747 = vmatprep.subr.mxu0 0.0
          %748 = vmatpush2.msra.mxu0 0.0
          %749 = vmatprep.subr.mxu0 0.0
          %750 = vmatpush2.msra.mxu0 0.0
          %751 = vmatprep.subr.mxu0 0.0
          %752 = vmatpush2.msra.mxu0 0.0
          %753 = vmatprep.subr.mxu0 0.0
          %754 = vmatpush2.msra.mxu0 0.0
          %755 = vmatprep.subr.mxu0 0.0
          %756 = vmatpush2.msra.mxu0 0.0
          %757 = vmatprep.subr.mxu0 0.0
          %758 = vmatpush2.msra.mxu0 0.0
          %759 = vmatprep.subr.mxu0 0.0
          %760 = vmatpush2.msra.mxu0 0.0
          %761 = vmatprep.subr.mxu0 0.0
          %762 = vmatpush2.msra.mxu0 0.0
          %763 = vmatprep.subr.mxu0 0.0
          %764 = vmatpush2.msra.mxu0 0.0
          %765 = vmatprep.subr.mxu0 0.0
          %766 = vmatpush2.msra.mxu0 0.0
          %767 = vmatprep.subr.mxu0 0.0
          %768 = vmatpush2.msra.mxu0 0.0
          %769 = vmatprep.subr.mxu0 0.0
          %770 = vmatpush2.msra.mxu0 0.0
          %771 = vmatprep.subr.mxu0 0.0
          %772 = vmatpush2.msra.mxu0 0.0
          %773 = vmatprep.subr.mxu0 0.0
          %774 = vmatpush2.msra.mxu0 0.0
          %775 = vmatprep.subr.mxu0 0.0
          %776 = vmatpush2.msra.mxu0 0.0
          %777 = vmatprep.subr.mxu0 0.0
          %778 = vmatpush2.msra.mxu0 0.0
          %779 = vmatprep.mubr.f32.mxu0 0.0
          %780 = vmatmul.mubr.f32.gmra.mxu0 %v710
          %v781 = vpop.f32.mrf.mxu0
          %v782 = vadd.f32 %v706, %v781
          %v783 = vpop.f32.mrf.mxu0
          %784 = vmatprep.mubr.f32.mxu0 0.0
          %785 = vmatmul.mubr.f32.gmra.mxu0 %v713
          %v786 = vpop.f32.mrf.mxu0
          %v787 = vadd.f32 %v706, %v786
          %v788 = vpop.f32.mrf.mxu0
          %789 = vdwg.mxu0
          %v790 = vmax.f32 %v782, 0.0
          %v791 = vmax.f32 %v787, 0.0
          %v792 = vld [vmem:[#allocation3] sm:$0x1]
          %vm793 = vcmask 523264
          %v794 = vsel %vm793, %v790, 0.0
          %v795 = vsel %vm793, %v791, 0.0
          %v796 = vadd.f32 %v794, %v795
          %v797 = vrot.slane %v796, 4
          %v798 = vadd.f32 %v796, %v797
          %v799 = vrot.slane %v798, 2
          %v800 = vadd.f32 %v798, %v799
          %v801 = vrot.slane %v800, 1
          %v802 = vadd.f32 %v800, %v801
          %v803 = vadd.f32 %v792, %v802
          %vm804 = vcmask 516096
          %805 = vst.msk [vmem:[#allocation3] sm:$0x1] %vm804, %v803
          // Predicated region
          $region97: #{tpu_custom_call.1} parent=91 // pred_check
            %p806 = pneg %p631
          $region98: #{tpu_custom_call.1} parent=91 // pred_check_branch
            %808 = sbr.rel (%p806) target = $region100
          $region99: #{tpu_custom_call.1} parent=91 // pred_region
            %v809 = vld [vmem:[#allocation3] sm:$0x1]
            %v810 = vmul.f32 %v809, 0.0625
            %vm811 = vcmp.gt.f32.partialorder %v810, 0.0
            %v812 = vmul.f32 %v810, 1.442695
            %v813 = vpow.pop %v812
            %v814 = vsub.f32 %v813, 1.0
            %v815 = vmul.f32 %v814, 1.6732632
            %v816 = vsel %vm811, %v810, %v815
            %v817 = vmul.f32 %v816, 1.050701
            %v818 = vld [vmem:[#allocation4] sm:$0x1]
            %v819 = vld [vmem:[%s7] sm:$0xff]
            %v820 = vld [vmem:[%s8] sm:$0x1]
            %vm821 = vcmask 64512
            %v823 = vsel %vm821, %v818, 0
            %825 = vmatprep.subr.mxu0 0.0
            %826 = vmatpush1.msra.mxu0 0.0
            %827 = vmatprep.subr.mxu0 0.0
            %828 = vmatpush1.msra.mxu0 0.0
            %829 = vmatprep.subr.mxu0 0.0
            %830 = vmatpush1.msra.mxu0 0.0
            %831 = vmatprep.subr.mxu0 0.0
            %832 = vmatpush1.msra.mxu0 0.0
            %833 = vmatprep.subr.mxu0 0.0
            %834 = vmatpush1.msra.mxu0 0.0
            %835 = vmatprep.subr.mxu0 0.0
            %836 = vmatpush1.msra.mxu0 0.0
            %837 = vmatprep.subr.mxu0 0.0
            %838 = vmatpush1.msra.mxu0 0.0
            %839 = vmatprep.subr.mxu0 0.0
            %840 = vmatpush1.msra.mxu0 0.0
            %841 = vmatprep.subr.mxu0 0.0
            %842 = vmatpush1.msra.mxu0 0.0
            %843 = vmatprep.subr.mxu0 0.0
            %844 = vmatpush1.msra.mxu0 0.0
            %845 = vmatprep.subr.mxu0 0.0
            %846 = vmatpush1.msra.mxu0 0.0
            %847 = vmatprep.subr.mxu0 0.0
            %848 = vmatpush1.msra.mxu0 0.0
            %849 = vmatprep.subr.mxu0 0.0
            %850 = vmatpush1.msra.mxu0 0.0
            %851 = vmatprep.subr.mxu0 0.0
            %852 = vmatpush1.msra.mxu0 0.0
            %853 = vmatprep.subr.mxu0 0.0
            %854 = vmatpush1.msra.mxu0 0.0
            %855 = vmatprep.subr.mxu0 0.0
            %856 = vmatpush1.msra.mxu0 %v819
            %857 = vmatprep.subr.mxu0 0.0
            %858 = vmatpush2.msra.mxu0 0.0
            %859 = vmatprep.subr.mxu0 0.0
            %860 = vmatpush2.msra.mxu0 0.0
            %861 = vmatprep.subr.mxu0 0.0
            %862 = vmatpush2.msra.mxu0 0.0
            %863 = vmatprep.subr.mxu0 0.0
            %864 = vmatpush2.msra.mxu0 0.0
            %865 = vmatprep.subr.mxu0 0.0
            %866 = vmatpush2.msra.mxu0 0.0
            %867 = vmatprep.subr.mxu0 0.0
            %868 = vmatpush2.msra.mxu0 0.0
            %869 = vmatprep.subr.mxu0 0.0
            %870 = vmatpush2.msra.mxu0 0.0
            %871 = vmatprep.subr.mxu0 0.0
            %872 = vmatpush2.msra.mxu0 0.0
            %873 = vmatprep.subr.mxu0 0.0
            %874 = vmatpush2.msra.mxu0 0.0
            %875 = vmatprep.subr.mxu0 0.0
            %876 = vmatpush2.msra.mxu0 0.0
            %877 = vmatprep.subr.mxu0 0.0
            %878 = vmatpush2.msra.mxu0 0.0
            %879 = vmatprep.subr.mxu0 0.0
            %880 = vmatpush2.msra.mxu0 0.0
            %881 = vmatprep.subr.mxu0 0.0
            %882 = vmatpush2.msra.mxu0 0.0
            %883 = vmatprep.subr.mxu0 0.0
            %884 = vmatpush2.msra.mxu0 0.0
            %885 = vmatprep.subr.mxu0 0.0
            %886 = vmatpush2.msra.mxu0 0.0
            %887 = vmatprep.subr.mxu0 0.0
            %888 = vmatpush2.msra.mxu0 0.0
            %889 = vmatprep.mubr.f32.mxu0 0.0
            %890 = vmatmul.mubr.f32.gmra.mxu0 %v823
            %v891 = vpop.f32.mrf.mxu0
            %v892 = vadd.f32 %v820, %v891
            %v893 = vpop.f32.mrf.mxu0
            %894 = vdwg.mxu0
            %v895 = vld [vmem:[#allocation12] sm:$0xff]
            %v896 = vld [vmem:[#allocation12 + $0x8] sm:$0xff]
            %v897 = vld [vmem:[#allocation12 + $0x10] sm:$0xff]
            %v898 = vld [vmem:[#allocation12 + $0x18] sm:$0xff]
            %v899 = vld [vmem:[#allocation12 + $0x20] sm:$0xff]
            %v900 = vld [vmem:[#allocation12 + $0x28] sm:$0xff]
            %v901 = vld [vmem:[#allocation12 + $0x30] sm:$0xff]
            %v902 = vld [vmem:[#allocation12 + $0x38] sm:$0xff]
            %v903 = vld [vmem:[#allocation12 + $0x40] sm:$0xff]
            %v904 = vld [vmem:[#allocation12 + $0x48] sm:$0xff]
            %v905 = vld [vmem:[#allocation12 + $0x50] sm:$0xff]
            %v906 = vld [vmem:[#allocation12 + $0x58] sm:$0xff]
            %v908 = vsel %vm708, %v892, 0
            %910 = vmatprep.subr.mxu0 0.0
            %911 = vmatpush1.msra.mxu0 0.0
            %912 = vmatprep.subr.mxu0 0.0
            %913 = vmatpush1.msra.mxu0 0.0
            %914 = vmatprep.subr.mxu0 0.0
            %915 = vmatpush1.msra.mxu0 0.0
            %916 = vmatprep.subr.mxu0 0.0
            %917 = vmatpush1.msra.mxu0 0.0
            %918 = vmatprep.subr.mxu0 0.0
            %919 = vmatpush1.msra.mxu0 0.0
            %920 = vmatprep.subr.mxu0 0.0
            %921 = vmatpush1.msra.mxu0 0.0
            %922 = vmatprep.subr.mxu0 0.0
            %923 = vmatpush1.msra.mxu0 0.0
            %924 = vmatprep.subr.mxu0 0.0
            %925 = vmatpush1.msra.mxu0 0.0
            %926 = vmatprep.subr.mxu0 0.0
            %927 = vmatpush1.msra.mxu0 0.0
            %928 = vmatprep.subr.mxu0 0.0
            %929 = vmatpush1.msra.mxu0 0.0
            %930 = vmatprep.subr.mxu0 0.0
            %931 = vmatpush1.msra.mxu0 0.0
            %932 = vmatprep.subr.mxu0 0.0
            %933 = vmatpush1.msra.mxu0 0.0
            %934 = vmatprep.subr.mxu0 0.0
            %935 = vmatpush1.msra.mxu0 %v906
            %936 = vmatprep.subr.mxu0 0.0
            %937 = vmatpush1.msra.mxu0 %v905
            %938 = vmatprep.subr.mxu0 0.0
            %939 = vmatpush1.msra.mxu0 %v904
            %940 = vmatprep.subr.mxu0 0.0
            %941 = vmatpush1.msra.mxu0 %v903
            %942 = vmatprep.subr.mxu0 0.0
            %943 = vmatpush2.msra.mxu0 0.0
            %944 = vmatprep.subr.mxu0 0.0
            %945 = vmatpush2.msra.mxu0 0.0
            %946 = vmatprep.subr.mxu0 0.0
            %947 = vmatpush2.msra.mxu0 0.0
            %948 = vmatprep.subr.mxu0 0.0
            %949 = vmatpush2.msra.mxu0 0.0
            %950 = vmatprep.subr.mxu0 0.0
            %951 = vmatpush2.msra.mxu0 0.0
            %952 = vmatprep.subr.mxu0 0.0
            %953 = vmatpush2.msra.mxu0 0.0
            %954 = vmatprep.subr.mxu0 0.0
            %955 = vmatpush2.msra.mxu0 0.0
            %956 = vmatprep.subr.mxu0 0.0
            %957 = vmatpush2.msra.mxu0 0.0
            %958 = vmatprep.subr.mxu0 0.0
            %959 = vmatpush2.msra.mxu0 0.0
            %960 = vmatprep.subr.mxu0 0.0
            %961 = vmatpush2.msra.mxu0 0.0
            %962 = vmatprep.subr.mxu0 0.0
            %963 = vmatpush2.msra.mxu0 0.0
            %964 = vmatprep.subr.mxu0 0.0
            %965 = vmatpush2.msra.mxu0 0.0
            %966 = vmatprep.subr.mxu0 0.0
            %967 = vmatpush2.msra.mxu0 0.0
            %968 = vmatprep.subr.mxu0 0.0
            %969 = vmatpush2.msra.mxu0 0.0
            %970 = vmatprep.subr.mxu0 0.0
            %971 = vmatpush2.msra.mxu0 0.0
            %972 = vmatprep.subr.mxu0 0.0
            %973 = vmatpush2.msra.mxu0 0.0
            %974 = vmatprep.mubr.f32.mxu0 0.0
            %975 = vmatmul.mubr.f32.gmra.mxu0 %v908
            %v976 = vpop.f32.mrf.mxu0
            %v977 = vadd.f32 0.0, %v976
            %v978 = vpop.f32.mrf.mxu0
            %979 = vdwg.mxu0
            %v981 = vsel %vm793, %v817, 0
            %983 = vmatprep.subr.mxu0 0.0
            %984 = vmatpush1.msra.mxu0 0.0
            %985 = vmatprep.subr.mxu0 0.0
            %986 = vmatpush1.msra.mxu0 0.0
            %987 = vmatprep.subr.mxu0 0.0
            %988 = vmatpush1.msra.mxu0 0.0
            %989 = vmatprep.subr.mxu0 0.0
            %990 = vmatpush1.msra.mxu0 0.0
            %991 = vmatprep.subr.mxu0 0.0
            %992 = vmatpush1.msra.mxu0 0.0
            %993 = vmatprep.subr.mxu0 0.0
            %994 = vmatpush1.msra.mxu0 0.0
            %995 = vmatprep.subr.mxu0 0.0
            %996 = vmatpush1.msra.mxu0 0.0
            %997 = vmatprep.subr.mxu0 0.0
            %998 = vmatpush1.msra.mxu0 0.0
            %999 = vmatprep.subr.mxu0 0.0
            %1000 = vmatpush1.msra.mxu0 %v902
            %1001 = vmatprep.subr.mxu0 0.0
            %1002 = vmatpush1.msra.mxu0 %v901
            %1003 = vmatprep.subr.mxu0 0.0
            %1004 = vmatpush1.msra.mxu0 %v900
            %1005 = vmatprep.subr.mxu0 0.0
            %1006 = vmatpush1.msra.mxu0 %v899
            %1007 = vmatprep.subr.mxu0 0.0
            %1008 = vmatpush1.msra.mxu0 %v898
            %1009 = vmatprep.subr.mxu0 0.0
            %1010 = vmatpush1.msra.mxu0 %v897
            %1011 = vmatprep.subr.mxu0 0.0
            %1012 = vmatpush1.msra.mxu0 %v896
            %1013 = vmatprep.subr.mxu0 0.0
            %1014 = vmatpush1.msra.mxu0 %v895
            %1015 = vmatprep.subr.mxu0 0.0
            %1016 = vmatpush2.msra.mxu0 0.0
            %1017 = vmatprep.subr.mxu0 0.0
            %1018 = vmatpush2.msra.mxu0 0.0
            %1019 = vmatprep.subr.mxu0 0.0
            %1020 = vmatpush2.msra.mxu0 0.0
            %1021 = vmatprep.subr.mxu0 0.0
            %1022 = vmatpush2.msra.mxu0 0.0
            %1023 = vmatprep.subr.mxu0 0.0
            %1024 = vmatpush2.msra.mxu0 0.0
            %1025 = vmatprep.subr.mxu0 0.0
            %1026 = vmatpush2.msra.mxu0 0.0
            %1027 = vmatprep.subr.mxu0 0.0
            %1028 = vmatpush2.msra.mxu0 0.0
            %1029 = vmatprep.subr.mxu0 0.0
            %1030 = vmatpush2.msra.mxu0 0.0
            %1031 = vmatprep.subr.mxu0 0.0
            %1032 = vmatpush2.msra.mxu0 0.0
            %1033 = vmatprep.subr.mxu0 0.0
            %1034 = vmatpush2.msra.mxu0 0.0
            %1035 = vmatprep.subr.mxu0 0.0
            %1036 = vmatpush2.msra.mxu0 0.0
            %1037 = vmatprep.subr.mxu0 0.0
            %1038 = vmatpush2.msra.mxu0 0.0
            %1039 = vmatprep.subr.mxu0 0.0
            %1040 = vmatpush2.msra.mxu0 0.0
            %1041 = vmatprep.subr.mxu0 0.0
            %1042 = vmatpush2.msra.mxu0 0.0
            %1043 = vmatprep.subr.mxu0 0.0
            %1044 = vmatpush2.msra.mxu0 0.0
            %1045 = vmatprep.subr.mxu0 0.0
            %1046 = vmatpush2.msra.mxu0 0.0
            %1047 = vmatprep.mubr.f32.mxu0 0.0
            %1048 = vmatmul.mubr.f32.gmra.mxu0 %v981
            %v1049 = vpop.f32.mrf.mxu0
            %v1050 = vadd.f32 %v977, %v1049
            %v1051 = vpop.f32.mrf.mxu0
            %1052 = vdwg.mxu0
            %v1053 = vld [vmem:[%s10] sm:$0x1]
            %v1054 = vadd.f32 %v1050, %v1053
            %vm1055 = vcmask 1040384
            %v1056 = vsel %vm1055, %v1054, -inf
            %1057 = vmax.xlane.f32.xlu0 %v1056
            %v1058 = vpop.xlane.xlu0 %1057
            %v1059 = vsub.f32 %v1054, %v1058
            %v1060 = vmul.f32 %v1059, 1.442695
            %v1061 = vpow.pop %v1060
            %v1062 = vsel %vm1055, %v1061, 0.0
            %1063 = vadd.xlane.f32.xlu0 %v1062
            %v1064 = vpop.xlane.xlu0 %1063
            %v1065 = vlog2.pop %v1064
            %v1066 = vmul.f32 %v1065, 0.6931472
            %v1067 = vadd.f32 %v1058, %v1066
            %v1068 = vsub.f32 %v1054, %v1067
            %1069 = vst [vmem:[#allocation13] sm:$0x1] %v1068
          $region100: #{tpu_custom_call.1} parent=91 // pred_fallthru
            _
        $region92: #{tpu_custom_call.1} parent=63 // pred_fallthru
          _
        // Predicated region
        $region101: #{tpu_custom_call.1} parent=63 // pred_check
          %p1070 = pneg %p287
        $region102: #{tpu_custom_call.1} parent=63 // pred_check_branch
          %1072 = sbr.rel (%p1070) target = $region104
        $region103: #{tpu_custom_call.1} parent=63 // pred_region
          %s1074 = ssub.s32 16, 16
          %1075 = vsyncadd [#allocation6], %s1074
          %s1077 = sshll.u32 [#allocation13], 4
          %s1078 = int_to_ptr.vmem [resolvable:$true] %s1077
          %1080 = dma.vmem_to_hbm [thread:$0]  %s1078, 16, %s11, [#allocation6]
        $region104: #{tpu_custom_call.1} parent=63 // pred_fallthru
          _
        // Predicated region
        $region105: #{tpu_custom_call.1} parent=63 // pred_check
          %p1081 = pneg %p287
        $region106: #{tpu_custom_call.1} parent=63 // pred_check_branch
          %1083 = sbr.rel (%p1081) target = $region108
        $region107: #{tpu_custom_call.1} parent=63 // pred_region
          %1084 = dma.done [#allocation6], 16
        $region108: #{tpu_custom_call.1} parent=63 // pred_fallthru
          _
      $region64: #{tpu_custom_call.1} parent=5 // pred_fallthru
        _
      %p1085 = scmp.le.s32.totalorder 2, %s21
      // Predicated region
      $region109: #{tpu_custom_call.1} parent=5 // pred_check
        %p1086 = pneg %p1085
      $region110: #{tpu_custom_call.1} parent=5 // pred_check_branch
        %1088 = sbr.rel (%p1086) target = $region112
      $region111: #{tpu_custom_call.1} parent=5 // pred_region
        %s1089 = ssub.s32 %s21, 2
      $region112: #{tpu_custom_call.1} parent=5 // pred_fallthru
        _
    $region6: #{tpu_custom_call.1} parent=1 // loop_footer
      %s25 = sadd.s32 1, %s21
    $region7: #{tpu_custom_call.1} parent=1 // loop_footer_branch
      %20 = sbr.rel target = $region3
    $region8: #{tpu_custom_call.1} parent=1 // loop_exit
      _
    %1090 = vsyncpa [#allocation5], 1
    %s1091 = scalar_lea.sflag [#allocation5], 1
    %1092 = vsyncpa %s1091, 1
    %1093 = vsyncpa [#allocation8], 1
    %1094 = vsyncpa [#allocation11], 1
    %1095 = vsyncpa [#allocation6], 1
    %s1096 = scalar_lea.sflag [#allocation6], 1
    %1097 = vsyncpa %s1096, 1

</llo_original>
